<compile_context>
chip_gen: v5e
topology: v5e:2x2
jax: 0.10.0
libtpu: 0.0.40
codegen_flags: <defaults>
</compile_context>

<pallas_src>
import functools

import numpy as np
import jax
import jax.numpy as jnp
from jax import lax
from jax.experimental import pallas as pl
from jax.experimental.pallas import tpu as pltpu


# ----------------------------------------------------------------------------
# Constant construction (glue, matches __init__ / irfft semantics)
# ----------------------------------------------------------------------------
def irfft_synthesis_basis(k: int, n_tbins: int) -> jnp.ndarray:
    """[k, n_tbins] matrix B s.t. irfft(zero-DC half-spectrum built from the k
    coding outputs, n=n_tbins) == codes @ B   (exact, since only k/2+1 of the
    n_tbins//2+1 frequency coefficients are non-zero)."""
    assert k % 2 == 0, "even k: channels pair up as (real, imag) phasor parts"
    assert k // 2 < n_tbins // 2, "no Nyquist coefficient expected"
    t = np.arange(n_tbins, dtype=np.float64)
    rows = []
    for j in range(k // 2):
        ang = 2.0 * np.pi * (j + 1) * t / n_tbins
        rows.append((2.0 / n_tbins) * np.cos(ang))   # even channel -> +Re
        rows.append((2.0 / n_tbins) * np.sin(ang))   # odd channel  -> -Im
    return jnp.asarray(np.stack(rows, axis=0), dtype=jnp.float32)   # (k, T)


# ----------------------------------------------------------------------------
# Pallas kernel: one invocation, batched over all rows
# ----------------------------------------------------------------------------
def _ifft_coding_kernel(hist_ref, wt_ref, basis_ref, recon_ref, depth_ref, *,
                        beta):
    hist = hist_ref[...]                                         # (B, T) f32

    # Conv1d(in=T, out=K, kernel_size=1, bias=False) == hist @ W^T -> (B, K)
    codes = jnp.dot(hist, wt_ref[...],
                    preferred_element_type=jnp.float32)

    # irfft of the (K/2+1)-coefficient half-spectrum == codes @ basis -> (B, T)
    recon = jnp.dot(codes, basis_ref[...],
                    preferred_element_type=jnp.float32)
    recon_ref[...] = recon                                       # lane-dense store

    # softargmax over the time (lane) axis, numerically stable.
    z = beta * recon
    z = z - jnp.max(z, axis=-1, keepdims=True)
    p = jnp.exp(z)                                               # EUP
    denom = jnp.sum(p, axis=-1, keepdims=True)                   # XLU lane reduce
    idx = lax.broadcasted_iota(jnp.int32, p.shape, 1).astype(jnp.float32)
    num = jnp.sum(p * idx, axis=-1, keepdims=True)
    depth_ref[...] = num / denom                                 # (B, 1)


def ifft_coding_forward(input_hist, cmat_weight, *, beta=100.0):
    """input_hist: [B, n_tbins, 1]; cmat_weight: [k, n_tbins, 1] (Conv1d weight)."""
    B, T, L = input_hist.shape
    assert L == 1, "forward concatenates a [B,1,1] zero DC term -> last dim must be 1"
    K = cmat_weight.shape[0]

    hist2d = input_hist[:, :, 0].astype(jnp.float32)             # (B, T)
    wt = cmat_weight.reshape(K, T).T.astype(jnp.float32)         # (T, K)
    basis = irfft_synthesis_basis(K, T)                          # (K, T)

    recon2d, depth2d = pl.pallas_call(
        functools.partial(_ifft_coding_kernel, beta=float(beta)),
        grid=(1,),
        in_specs=[
            pl.BlockSpec((B, T), lambda i: (0, 0)),              # histograms
            pl.BlockSpec((T, K), lambda i: (0, 0)),              # coding matrix^T
            pl.BlockSpec((K, T), lambda i: (0, 0)),              # irfft synthesis
        ],
        out_specs=(
            pl.BlockSpec((B, T), lambda i: (0, 0)),              # recon (lane-dense)
            pl.BlockSpec((B, 1), lambda i: (0, 0)),              # pred depths
        ),
        out_shape=(
            jax.ShapeDtypeStruct((B, T), jnp.float32),
            jax.ShapeDtypeStruct((B, 1), jnp.float32),
        ),
        compiler_params=pltpu.CompilerParams(
            dimension_semantics=("arbitrary",)),
    )(hist2d, wt, basis)

    recon = recon2d[:, :, None]          # [B, n_tbins, 1], matches torch output
    pred_depths = depth2d[:, 0]          # [B]
    return recon, pred_depths


# ----------------------------------------------------------------------------
# Pure-JAX reference of the same forward pass (torch semantics)
# ----------------------------------------------------------------------------
def reference_forward(input_hist, cmat_weight, beta):
    B, T, _ = input_hist.shape
    w = cmat_weight[:, :, 0]                                     # (K, T)
    out = jnp.einsum('btl,ct->bcl', input_hist, w,
                     precision=jax.lax.Precision.HIGHEST)        # (B, K, 1)
    phasors = out[:, 0::2, :] - 1j * out[:, 1::2, :]             # (B, K/2, 1)
    zeros = jnp.zeros((B, 1, 1), dtype=phasors.dtype)
    phasors = jnp.concatenate([zeros, phasors], axis=-2)         # (B, K/2+1, 1)
    # torch.fft.irfft(phasors, dim=-2, n=T): zero-pad half-spectrum to T//2+1
    pad = T // 2 + 1 - phasors.shape[1]
    spec = jnp.concatenate(
        [phasors, jnp.zeros((B, pad, 1), dtype=phasors.dtype)], axis=-2)
    recon = jnp.fft.irfft(spec, n=T, axis=-2).astype(jnp.float32)  # (B, T, 1)
    sm = jax.nn.softmax(beta * recon, axis=-2)
    idx = jnp.arange(T, dtype=jnp.float32).reshape(1, T, 1)
    pred = jnp.sum(sm * idx, axis=-2)[:, 0]                       # (B,)
    return recon, pred


if __name__ == "__main__":
    B, T, K = 4, 128, 4          # small version of (batch, n_tbins=1024, k)
    BETA = 100.0

    key = jax.random.PRNGKey(0)
    k_hist, k_w = jax.random.split(key)

    # Non-negative "histogram" input and a kaiming_uniform-style coding matrix.
    input_hist = jax.random.uniform(k_hist, (B, T, 1), dtype=jnp.float32,
                                    minval=0.0, maxval=4.0)
    bound = float(np.sqrt(6.0 / T))
    cmat_weight = jax.random.uniform(k_w, (K, T, 1), dtype=jnp.float32,
                                     minval=-bound, maxval=bound)

    recon, pred_depths = ifft_coding_forward(input_hist, cmat_weight, beta=BETA)
    jax.block_until_ready((recon, pred_depths))

    ref_recon, ref_pred = reference_forward(input_hist, cmat_weight, BETA)
    np.testing.assert_allclose(np.asarray(recon), np.asarray(ref_recon),
                               rtol=2e-3, atol=2e-4)
    np.testing.assert_allclose(np.asarray(pred_depths), np.asarray(ref_pred),
                               rtol=2e-3, atol=5e-2)

    print("KERNEL_OK")
</pallas_src>

<mosaic_0001>
module attributes {stable_mosaic.version = 11 : i64} {
  func.func @_ifft_coding_kernel(%arg0: i32, %arg1: memref<4x128xf32, #tpu.memory_space<vmem>>, %arg2: memref<128x4xf32, #tpu.memory_space<vmem>>, %arg3: memref<4x128xf32, #tpu.memory_space<vmem>>, %arg4: memref<4x128xf32, #tpu.memory_space<vmem>>, %arg5: memref<4x1xf32, #tpu.memory_space<vmem>>) attributes {dimension_semantics = [#tpu.dimension_semantics<arbitrary>], iteration_bounds = array<i64: 1>, scalar_prefetch = 0 : i64, scratch_operands = 0 : i64, tpu.core_type = #tpu.core_type<tc>, window_params = [{pipeline_mode = #tpu.pipeline_mode<synchronous>, transform_indices = @transform_0, window_bounds = array<i64: 4, 128>}, {pipeline_mode = #tpu.pipeline_mode<synchronous>, transform_indices = @transform_1, window_bounds = array<i64: 128, 4>}, {pipeline_mode = #tpu.pipeline_mode<synchronous>, transform_indices = @transform_2, window_bounds = array<i64: 4, 128>}, {pipeline_mode = #tpu.pipeline_mode<synchronous>, transform_indices = @transform_3, window_bounds = array<i64: 4, 128>}, {pipeline_mode = #tpu.pipeline_mode<synchronous>, transform_indices = @transform_4, window_bounds = array<i64: 4, 1>}]} {
    %c0 = arith.constant 0 : index
    %c0_0 = arith.constant 0 : index
    %0 = vector.load %arg1[%c0, %c0_0] : memref<4x128xf32, #tpu.memory_space<vmem>>, vector<4x128xf32>
    %c0_1 = arith.constant 0 : index
    %c0_2 = arith.constant 0 : index
    %1 = vector.load %arg2[%c0_1, %c0_2] : memref<128x4xf32, #tpu.memory_space<vmem>>, vector<128x4xf32>
    %cst = arith.constant dense<0.000000e+00> : vector<4x4xf32>
    %2 = tpu.matmul %0, %1, %cst {dimension_numbers = #tpu.dot_dimension_numbers<[1], [0], [0], [1], [0, 0, 1, 1], [], []>} : vector<4x128xf32>, vector<128x4xf32>, vector<4x4xf32> -> vector<4x4xf32>
    %c0_3 = arith.constant 0 : index
    %c0_4 = arith.constant 0 : index
    %3 = vector.load %arg3[%c0_3, %c0_4] : memref<4x128xf32, #tpu.memory_space<vmem>>, vector<4x128xf32>
    %cst_5 = arith.constant dense<0.000000e+00> : vector<4x128xf32>
    %4 = tpu.matmul %2, %3, %cst_5 {dimension_numbers = #tpu.dot_dimension_numbers<[1], [0], [0], [1], [0, 0, 1, 1], [], []>} : vector<4x4xf32>, vector<4x128xf32>, vector<4x128xf32> -> vector<4x128xf32>
    %c0_6 = arith.constant 0 : index
    %c0_7 = arith.constant 0 : index
    %5 = vector.load %arg4[%c0_6, %c0_7] : memref<4x128xf32, #tpu.memory_space<vmem>>, vector<4x128xf32>
    tpu.vector_store %arg4[%c0_6, %c0_7], %4 {strides = array<i32>} : memref<4x128xf32, #tpu.memory_space<vmem>>, vector<4x128xf32>,
    %cst_8 = arith.constant 1.000000e+02 : f32
    %6 = vector.broadcast %cst_8 : f32 to vector<4x128xf32>
    %7 = arith.mulf %6, %4 : vector<4x128xf32>
    %cst_9 = arith.constant dense<0xFF800000> : vector<4xf32>
    %8 = vector.multi_reduction <maximumf>, %7, %cst_9 [1] : vector<4x128xf32> to vector<4xf32>
    %9 = vector.shape_cast %8 : vector<4xf32> to vector<4x1xf32>
    %10 = vector.broadcast %9 : vector<4x1xf32> to vector<4x128xf32>
    %11 = arith.subf %7, %10 : vector<4x128xf32>
    %12 = math.exp %11 : vector<4x128xf32>
    %cst_10 = arith.constant dense<0.000000e+00> : vector<4xf32>
    %13 = vector.multi_reduction <add>, %12, %cst_10 [1] : vector<4x128xf32> to vector<4xf32>
    %14 = vector.shape_cast %13 : vector<4xf32> to vector<4x1xf32>
    %15 = tpu.iota {dimensions = array<i32: 1>} : vector<4x128xi32>
    %16 = arith.sitofp %15 : vector<4x128xi32> to vector<4x128xf32>
    %17 = arith.mulf %12, %16 : vector<4x128xf32>
    %cst_11 = arith.constant dense<0.000000e+00> : vector<4xf32>
    %18 = vector.multi_reduction <add>, %17, %cst_11 [1] : vector<4x128xf32> to vector<4xf32>
    %19 = vector.shape_cast %18 : vector<4xf32> to vector<4x1xf32>
    %20 = arith.divf %19, %14 : vector<4x1xf32>
    %c0_12 = arith.constant 0 : index
    %c0_13 = arith.constant 0 : index
    %21 = vector.load %arg5[%c0_12, %c0_13] : memref<4x1xf32, #tpu.memory_space<vmem>>, vector<4x1xf32>
    tpu.vector_store %arg5[%c0_12, %c0_13], %20 {strides = array<i32>} : memref<4x1xf32, #tpu.memory_space<vmem>>, vector<4x1xf32>,
    return
  }
  func.func @transform_0(%arg0: i32) -> (i32, i32) {
    %c0_i32 = arith.constant 0 : i32
    %c0_i32_0 = arith.constant 0 : i32
    %c0_i32_1 = arith.constant 0 : i32
    return %c0_i32, %c0_i32_0 : i32, i32
  }
  func.func @transform_1(%arg0: i32) -> (i32, i32) {
    %c0_i32 = arith.constant 0 : i32
    %c0_i32_0 = arith.constant 0 : i32
    %c0_i32_1 = arith.constant 0 : i32
    return %c0_i32, %c0_i32_0 : i32, i32
  }
  func.func @transform_2(%arg0: i32) -> (i32, i32) {
    %c0_i32 = arith.constant 0 : i32
    %c0_i32_0 = arith.constant 0 : i32
    %c0_i32_1 = arith.constant 0 : i32
    return %c0_i32, %c0_i32_0 : i32, i32
  }
  func.func @transform_3(%arg0: i32) -> (i32, i32) {
    %c0_i32 = arith.constant 0 : i32
    %c0_i32_0 = arith.constant 0 : i32
    %c0_i32_1 = arith.constant 0 : i32
    return %c0_i32, %c0_i32_0 : i32, i32
  }
  func.func @transform_4(%arg0: i32) -> (i32, i32) {
    %c0_i32 = arith.constant 0 : i32
    %c0_i32_0 = arith.constant 0 : i32
    %c0_i32_1 = arith.constant 0 : i32
    return %c0_i32, %c0_i32_0 : i32, i32
  }
}

</mosaic_0001>

<llo_original>
// kernel: tpu_custom_call.1
$region0: #{tpu_custom_call.1}
  #allocation0 [shape = 'u32[]', space=smem, size = 0x4, offset = 0x4, fixed_abs, tag = 'smem constant byte address 0x4 - core index']
  #allocation1 [shape = 'u32[72,128]{1,0:T(1,128)}', space=vmem, size = 0x9000, scoped, tag = 'internal scratch']
  %s0 = inlined_call_operand.vmem [shape: f32[4,128], index: 0, kind: input, shape index: {}]
  %s1 = inlined_call_operand.vmem [shape: f32[128,4], index: 1, kind: input, shape index: {}]
  %s2 = inlined_call_operand.vmem [shape: f32[4,128], index: 2, kind: input, shape index: {}]
  %s3 = inlined_call_operand.hbm [shape: f32[4,128], index: 3, kind: output, shape index: {0}]
  %s4 = inlined_call_operand.vmem [shape: f32[4,1], index: 4, kind: output, shape index: {1}]
  %5 = xla_tuple %s3, %s4
  %s6 = sld [smem:[#allocation0]]
  $region30: #{tpu_custom_call.1} parent=0
    _
  %s8 = ssub.s32 1, %s6
  %s9 = scalar_select 0, %s8, %s6
  $region1: #{tpu_custom_call.1} parent=0
    #allocation2 [shape = 'u8[2048]{0}', space=vmem, size = 0x800, scoped, tag = 'output window, operand 0, single buffered']
    #allocation3 [shape = 's32[1]{0}', space=sflag, size = 0x4, scoped, tag = 'scoped memory for tpu_custom_call.1']
    %10 = vsyncpa [#allocation3], 0
    // Predicated region
    $region2: #{tpu_custom_call.1} parent=1 // pred_check
      _
    $region3: #{tpu_custom_call.1} parent=1 // pred_check_branch
      %12 = sbr.rel (0) target = $region5
    $region4: #{tpu_custom_call.1} parent=1 // pred_region
      _
    $region5: #{tpu_custom_call.1} parent=1 // pred_fallthru
      _
    // Predicated region
    $region6: #{tpu_custom_call.1} parent=1 // pred_check
      _
    $region7: #{tpu_custom_call.1} parent=1 // pred_check_branch
      %14 = sbr.rel (0) target = $region9
    $region8: #{tpu_custom_call.1} parent=1 // pred_region
      _
    $region9: #{tpu_custom_call.1} parent=1 // pred_fallthru
      _
    // Predicated region
    $region10: #{tpu_custom_call.1} parent=1 // pred_check
      _
    $region11: #{tpu_custom_call.1} parent=1 // pred_check_branch
      %16 = sbr.rel (0) target = $region13
    $region12: #{tpu_custom_call.1} parent=1 // pred_region
      _
    $region13: #{tpu_custom_call.1} parent=1 // pred_fallthru
      _
    %v17 = vld [vmem:[%s0] sm:$0xf]
    %v18 = vld [vmem:[%s1] sm:$0xff]
    %v19 = vld [vmem:[%s1 + $0x8] sm:$0xff]
    %v20 = vld [vmem:[%s1 + $0x10] sm:$0xff]
    %v21 = vld [vmem:[%s1 + $0x18] sm:$0xff]
    %v22 = vld [vmem:[%s1 + $0x20] sm:$0xff]
    %v23 = vld [vmem:[%s1 + $0x28] sm:$0xff]
    %v24 = vld [vmem:[%s1 + $0x30] sm:$0xff]
    %v25 = vld [vmem:[%s1 + $0x38] sm:$0xff]
    %v26 = vld [vmem:[%s1 + $0x40] sm:$0xff]
    %v27 = vld [vmem:[%s1 + $0x48] sm:$0xff]
    %v28 = vld [vmem:[%s1 + $0x50] sm:$0xff]
    %v29 = vld [vmem:[%s1 + $0x58] sm:$0xff]
    %v30 = vld [vmem:[%s1 + $0x60] sm:$0xff]
    %v31 = vld [vmem:[%s1 + $0x68] sm:$0xff]
    %v32 = vld [vmem:[%s1 + $0x70] sm:$0xff]
    %v33 = vld [vmem:[%s1 + $0x78] sm:$0xff]
    %34 = vmatpush.msra.mxu0 %v33
    %35 = vmatpush.msra.mxu0 %v32
    %36 = vmatpush.msra.mxu0 %v31
    %37 = vmatpush.msra.mxu0 %v30
    %38 = vmatpush.msra.mxu0 %v29
    %39 = vmatpush.msra.mxu0 %v28
    %40 = vmatpush.msra.mxu0 %v27
    %41 = vmatpush.msra.mxu0 %v26
    %42 = vmatpush.msra.mxu0 %v25
    %43 = vmatpush.msra.mxu0 %v24
    %44 = vmatpush.msra.mxu0 %v23
    %45 = vmatpush.msra.mxu0 %v22
    %46 = vmatpush.msra.mxu0 %v21
    %47 = vmatpush.msra.mxu0 %v20
    %48 = vmatpush.msra.mxu0 %v19
    %49 = vmatpush.msra.mxu0 %v18
    %50 = vmatmul.f32.gmra.mxu0 %v17
    %v51 = vpop.f32.mrf.mxu0
    %v52 = vadd.f32 0.0, %v51
    %53 = vdwg.mxu0
    %v54 = vld [vmem:[%s2] sm:$0xf]
    %vm55 = vcmask 31744
    %v57 = vsel %vm55, %v52, 0
    %vm59 = vcmask 1043456
    %v61 = vsel %vm59, %v54, 0
    %63 = vmatpush.msra.mxu0 0.0
    %64 = vmatpush.msra.mxu0 0.0
    %65 = vmatpush.msra.mxu0 0.0
    %66 = vmatpush.msra.mxu0 0.0
    %67 = vmatpush.msra.mxu0 0.0
    %68 = vmatpush.msra.mxu0 0.0
    %69 = vmatpush.msra.mxu0 0.0
    %70 = vmatpush.msra.mxu0 0.0
    %71 = vmatpush.msra.mxu0 0.0
    %72 = vmatpush.msra.mxu0 0.0
    %73 = vmatpush.msra.mxu0 0.0
    %74 = vmatpush.msra.mxu0 0.0
    %75 = vmatpush.msra.mxu0 0.0
    %76 = vmatpush.msra.mxu0 0.0
    %77 = vmatpush.msra.mxu0 0.0
    %78 = vmatpush.msra.mxu0 %v61
    %79 = vmatmul.f32.gmra.mxu0 %v57
    %v80 = vpop.f32.mrf.mxu0
    %v81 = vadd.f32 0.0, %v80
    %82 = vdwg.mxu0
    %83 = vst [vmem:[#allocation2] sm:$0xf] %v81
    %v84 = vmul.f32 %v81, 100.0
    %v85 = vsel %vm59, %v84, -inf
    %86 = vmax.xlane.f32.xlu0 %v85
    %v87 = vpop.xlane.xlu0 %86
    %v88 = vsub.f32 %v84, %v87
    %v89 = vmul.f32 %v88, 1.442695
    %v90 = vpow.pop %v89
    %v91 = vsel %vm59, %v90, 0.0
    %92 = vadd.xlane.f32.xlu0 %v91
    %v93 = vpop.xlane.xlu0 %92
    %v94 = vlaneseq
    %v95 = vand.u32 %v94, 127
    %v96 = vcvt.s32.f32 %v95
    %v97 = vmul.f32 %v90, %v96
    %v98 = vsel %vm59, %v97, 0.0
    %99 = vadd.xlane.f32.xlu0 %v98
    %v100 = vpop.xlane.xlu0 %99
    %v101 = vrcp.pop %v93
    %v102 = vmul.f32 %v93, %v101
    %v103 = vsub.f32 1.0, %v102
    %v104 = vmul.f32 %v101, %v103
    %v105 = vadd.f32 %v101, %v104
    %vm106 = vweird.f32 %v93
    %vm107 = vweird.f32 %v101
    %vm108 = vmor %vm106, %vm107
    %v109 = vsel %vm108, %v101, %v105
    %v110 = vand.u32 2147483647, %v93
    %vm111 = vcmp.eq.f32.partialorder %v110, 8.507059e+37
    %v112 = vand.u32 %v93, 2147483648
    %v113 = vor.u32 1.1754944e-38, %v112
    %v114 = vsel %vm111, %v113, %v109
    %v115 = vmul.f32 %v100, %v114
    %vm116 = vcmask 3072
    %117 = vst.msk [vmem:[%s4] sm:$0xf] %vm116, %v115
    // Predicated region
    $region14: #{tpu_custom_call.1} parent=1 // pred_check
      _
    $region15: #{tpu_custom_call.1} parent=1 // pred_check_branch
      %119 = sbr.rel (0) target = $region17
    $region16: #{tpu_custom_call.1} parent=1 // pred_region
      %121 = vsyncadd [#allocation3], 0
      %s123 = sshll.u32 [#allocation2], 4
      %s124 = int_to_ptr.vmem [resolvable:$true] %s123
      %s125 = sshll.u32 %s3, 4
      %s126 = int_to_ptr.hbm [resolvable:$true] %s125
      %128 = dma.vmem_to_hbm [thread:$0]  %s124, 64, %s126, [#allocation3]
    $region17: #{tpu_custom_call.1} parent=1 // pred_fallthru
      _
    // Predicated region
    $region18: #{tpu_custom_call.1} parent=1 // pred_check
      _
    $region19: #{tpu_custom_call.1} parent=1 // pred_check_branch
      %130 = sbr.rel (0) target = $region21
    $region20: #{tpu_custom_call.1} parent=1 // pred_region
      _
    $region21: #{tpu_custom_call.1} parent=1 // pred_fallthru
      _
    // Predicated region
    $region22: #{tpu_custom_call.1} parent=1 // pred_check
      _
    $region23: #{tpu_custom_call.1} parent=1 // pred_check_branch
      %132 = sbr.rel (0) target = $region25
    $region24: #{tpu_custom_call.1} parent=1 // pred_region
      %134 = dma.done [#allocation3], 64
    $region25: #{tpu_custom_call.1} parent=1 // pred_fallthru
      _
    // Predicated region
    $region26: #{tpu_custom_call.1} parent=1 // pred_check
      _
    $region27: #{tpu_custom_call.1} parent=1 // pred_check_branch
      %136 = sbr.rel (0) target = $region29
    $region28: #{tpu_custom_call.1} parent=1 // pred_region
      _
    $region29: #{tpu_custom_call.1} parent=1 // pred_fallthru
      _
    %137 = vsyncpa [#allocation3], 1

</llo_original>
